<compile_context>
chip_gen: v7x
topology: tpu7x:2x2x1
jax: 0.10.0
libtpu: 0.0.40
codegen_flags: <defaults>
</compile_context>

<pallas_src>
import functools

import jax
import jax.numpy as jnp
from jax import lax
from jax.experimental import pallas as pl
from jax.experimental.pallas import tpu as pltpu


def _preact_resblock_kernel(x_ref, w1_ref, w2_ref, s1_ref, b1_ref,
                            s2_ref, b2_ref, cb2_ref, mask_ref,
                            o_ref, pad_ref, *, H, W, C):
    """One image per grid step, channel-major fused layout.

    x_ref   : (1, C, H*W)   f32 input, lane-dense
    w*_ref  : (Cout, 9*Cin) bf16 conv weights (tap-major, channel-minor rows)
    s*/b*   : (C, 1)        folded BN scale / bias (f32)
    cb2_ref : (Cout, 1)     conv2 bias (f32)
    mask_ref: (2, H*W)      bf16 {0,1}: row0 kills w==0 cols, row1 kills w==W-1
    o_ref   : (1, C, H*W)   f32 output, lane-dense
    pad_ref : (C, (H+2)*W + 2) bf16 scratch: 1-elem guards + 1-row top/bottom pad
    """
    HW = H * W
    PW = (H + 2) * W + 2
    cdt = pad_ref.dtype                          # bf16 MXU operand dtype

    x = x_ref[0].astype(jnp.float32)             # (C, HW) f32
    m_left = mask_ref[0:1, :]                    # (1, HW) zero where w == 0
    m_right = mask_ref[1:2, :]                   # (1, HW) zero where w == W-1

    # Zero only the halo (top/bottom padded row + guard elements), once per
    # grid step. The interior [W+1, W+1+HW) is fully overwritten before reads,
    # so no full-buffer zero-fill and no second zeroing pass.
    pad_ref[:, 0:W + 1] = jnp.zeros((C, W + 1), cdt)
    pad_ref[:, W + 1 + HW:PW] = jnp.zeros((C, W + 1), cdt)

    def conv3x3(h, w_ref):
        # h: (C, HW) bf16 activations. 'SAME' 3x3 conv as one im2col matmul.
        pad_ref[:, W + 1:W + 1 + HW] = h
        taps = []
        for di in range(3):
            for dj in range(3):
                t = pad_ref[:, di * W + dj:di * W + dj + HW]     # (C, HW)
                if dj == 0:                                       # left tap: col 0 wraps
                    t = t * m_left
                elif dj == 2:                                     # right tap: col W-1 wraps
                    t = t * m_right
                taps.append(t)
        patches = jnp.concatenate(taps, axis=0)                   # (9C, HW) bf16
        # single MXU matmul: bf16 operands, f32 accumulation, lane-dense output
        return jnp.dot(w_ref[...], patches,
                       preferred_element_type=jnp.float32)        # (Cout, HW) f32

    # ---- bn1 (folded affine) + relu -> conv1 (3x3, no bias) ----
    h1 = jnp.maximum(x * s1_ref[...] + b1_ref[...], 0.0).astype(cdt)
    y1 = conv3x3(h1, w1_ref)
    # ---- bn2 (folded affine) + relu -> conv2 (3x3, with bias) ----
    h2 = jnp.maximum(y1 * s2_ref[...] + b2_ref[...], 0.0).astype(cdt)
    y2 = conv3x3(h2, w2_ref) + cb2_ref[...]
    # ---- identity shortcut (in_ch == out_ch, stride == 1) ----
    o_ref[0] = (x + y2).astype(o_ref.dtype)


def preact_resblock_nchw(x_nchw, w1_hwio, w2_hwio, s1, b1, s2, b2, cb2):
    """NCHW-in / NCHW-out. No layout transposes: NCHW is reshaped to the
    channel-major fused (N, C, H*W) layout the kernel uses natively."""
    N, C, H, W = x_nchw.shape
    Cout = w2_hwio.shape[-1]
    assert C == Cout, "identity-shortcut configuration requires in_ch == out_ch"
    HW = H * W
    assert HW % 128 == 0, "lane-dense layout expects H*W to be a multiple of 128"

    x3 = x_nchw.reshape(N, C, HW).astype(jnp.float32)

    def to_mxu_w(w_hwio):
        # HWIO (3,3,Ci,Co) -> (Co, 9*Ci) with row index (di*3+dj)*Ci + ci
        co = w_hwio.shape[-1]
        ci = w_hwio.shape[2]
        return jnp.transpose(w_hwio, (3, 0, 1, 2)).reshape(co, 9 * ci).astype(jnp.bfloat16)

    w1m = to_mxu_w(w1_hwio)
    w2m = to_mxu_w(w2_hwio)

    def col(v):
        return jnp.asarray(v, jnp.float32).reshape(-1, 1)

    # horizontal-border masks for the fused-padding im2col gather
    wcol = jnp.arange(HW, dtype=jnp.int32) % W
    mask = jnp.stack([(wcol != 0), (wcol != W - 1)]).astype(jnp.bfloat16)   # (2, HW)

    kernel = functools.partial(_preact_resblock_kernel, H=H, W=W, C=C)
    full = lambda s: pl.BlockSpec(s, lambda n: (0, 0))

    out3 = pl.pallas_call(
        kernel,
        out_shape=jax.ShapeDtypeStruct((N, C, HW), jnp.float32),
        grid_spec=pltpu.PrefetchScalarGridSpec(
            num_scalar_prefetch=0,
            grid=(N,),
            in_specs=[
                pl.BlockSpec((1, C, HW), lambda n: (n, 0, 0)),   # x: one image per step
                full((C, 9 * C)),                                # w1
                full((Cout, 9 * C)),                             # w2
                full((C, 1)), full((C, 1)),                      # s1, b1
                full((C, 1)), full((C, 1)),                      # s2, b2
                full((Cout, 1)),                                 # conv2 bias
                full((2, HW)),                                   # border masks
            ],
            out_specs=pl.BlockSpec((1, C, HW), lambda n: (n, 0, 0)),
            scratch_shapes=[pltpu.VMEM((C, (H + 2) * W + 2), jnp.bfloat16)],
        ),
        compiler_params=pltpu.CompilerParams(
            dimension_semantics=("parallel",),        # v7x: one image per TensorCore
            vmem_limit_bytes=32 * 1024 * 1024,        # ample headroom for these tiles
        ),
    )(x3, w1m, w2m, col(s1), col(b1), col(s2), col(b2), col(cb2), mask)

    return out3.reshape(N, C, H, W)


def reference_forward(x_nchw, w1_hwio, w2_hwio, s1, b1, s2, b2, cb2,
                      conv_dtype=jnp.float32, precision=lax.Precision.HIGHEST):
    """Pure-JAX reference (lax.conv), NCHW in/out."""
    x = jnp.transpose(x_nchw, (0, 2, 3, 1)).astype(jnp.float32)
    dn = ('NHWC', 'HWIO', 'NHWC')

    def bn(v, s, b):
        return v * s.reshape(1, 1, 1, -1) + b.reshape(1, 1, 1, -1)

    def conv(v, w):
        return lax.conv_general_dilated(
            v.astype(conv_dtype), w.astype(conv_dtype), (1, 1), 'SAME',
            dimension_numbers=dn, preferred_element_type=jnp.float32,
            precision=precision)

    h = jax.nn.relu(bn(x, s1, b1))
    y1 = conv(h, w1_hwio)
    h2 = jax.nn.relu(bn(y1, s2, b2))
    y2 = conv(h2, w2_hwio) + cb2.reshape(1, 1, 1, -1)
    return jnp.transpose(x + y2, (0, 3, 1, 2))


if __name__ == "__main__":
    key = jax.random.PRNGKey(0)
    k = jax.random.split(key, 4)

    N, C, H, W = 2, 4, 16, 16                       # in_ch == out_ch == 4, stride == 1
    x_nchw = jax.random.normal(k[0], (N, C, H, W), jnp.float32)

    # kaiming-style deterministic conv weights (HWIO)
    fan_in = C * 3 * 3
    w1 = jax.random.normal(k[1], (3, 3, C, C), jnp.float32) * (2.0 / fan_in) ** 0.5
    w2 = jax.random.normal(k[2], (3, 3, C, C), jnp.float32) * (2.0 / fan_in) ** 0.5
    cb2 = jax.random.normal(k[3], (C,), jnp.float32) * 0.1     # conv2 bias

    # BatchNorm (eval mode): fold gamma/beta/running stats into scale & bias
    eps = 1e-5
    ar = jnp.arange(C, dtype=jnp.float32)

    def bn_fold(gamma, beta, mean, var):
        scale = gamma / jnp.sqrt(var + eps)
        return scale, beta - mean * scale

    s1, b1 = bn_fold(1.0 + 0.10 * ar, 0.05 * ar, 0.02 * ar, 1.0 + 0.03 * ar)
    s2, b2 = bn_fold(1.0 - 0.05 * ar, -0.02 * ar, 0.01 * ar, 1.0 + 0.02 * ar)

    out = preact_resblock_nchw(x_nchw, w1, w2, s1, b1, s2, b2, cb2)
    out = jax.block_until_ready(out)
    assert out.shape == (N, C, H, W) and out.dtype == jnp.float32

    # (1) numerics-matched reference: bf16 conv operands, f32 accumulation
    ref_bf16 = reference_forward(x_nchw, w1, w2, s1, b1, s2, b2, cb2,
                                 conv_dtype=jnp.bfloat16, precision=None)
    err_m = float(jnp.max(jnp.abs(out - ref_bf16)))
    assert jnp.allclose(out, ref_bf16, atol=1e-2, rtol=1e-2), \
        f"bf16-matched mismatch: max abs err {err_m}"

    # (2) full-f32 HIGHEST reference (module semantics), bf16-MXU tolerance
    ref_f32 = reference_forward(x_nchw, w1, w2, s1, b1, s2, b2, cb2)
    err_f = float(jnp.max(jnp.abs(out - ref_f32)))
    assert jnp.allclose(out, ref_f32, atol=1e-1, rtol=1e-1), \
        f"f32 mismatch: max abs err {err_f}"

    print("KERNEL_OK")
</pallas_src>

<mosaic_0001>
module attributes {stable_mosaic.version = 11 : i64} {
  func.func @_preact_resblock_kernel(%arg0: i32, %arg1: memref<1x4x256xf32, #tpu.memory_space<vmem>>, %arg2: memref<4x36xbf16, #tpu.memory_space<vmem>>, %arg3: memref<4x36xbf16, #tpu.memory_space<vmem>>, %arg4: memref<4x1xf32, #tpu.memory_space<vmem>>, %arg5: memref<4x1xf32, #tpu.memory_space<vmem>>, %arg6: memref<4x1xf32, #tpu.memory_space<vmem>>, %arg7: memref<4x1xf32, #tpu.memory_space<vmem>>, %arg8: memref<4x1xf32, #tpu.memory_space<vmem>>, %arg9: memref<2x256xbf16, #tpu.memory_space<vmem>>, %arg10: memref<1x4x256xf32, #tpu.memory_space<vmem>>, %arg11: memref<4x290xbf16, #tpu.memory_space<vmem>>) attributes {dimension_semantics = [#tpu.dimension_semantics<parallel>], iteration_bounds = array<i64: 2>, scalar_prefetch = 0 : i64, scratch_operands = 1 : i64, tpu.core_type = #tpu.core_type<tc>, window_params = [{transform_indices = @transform_0, window_bounds = array<i64: 1, 4, 256>}, {pipeline_mode = #tpu.pipeline_mode<synchronous>, transform_indices = @transform_1, window_bounds = array<i64: 4, 36>}, {pipeline_mode = #tpu.pipeline_mode<synchronous>, transform_indices = @transform_2, window_bounds = array<i64: 4, 36>}, {pipeline_mode = #tpu.pipeline_mode<synchronous>, transform_indices = @transform_3, window_bounds = array<i64: 4, 1>}, {pipeline_mode = #tpu.pipeline_mode<synchronous>, transform_indices = @transform_4, window_bounds = array<i64: 4, 1>}, {pipeline_mode = #tpu.pipeline_mode<synchronous>, transform_indices = @transform_5, window_bounds = array<i64: 4, 1>}, {pipeline_mode = #tpu.pipeline_mode<synchronous>, transform_indices = @transform_6, window_bounds = array<i64: 4, 1>}, {pipeline_mode = #tpu.pipeline_mode<synchronous>, transform_indices = @transform_7, window_bounds = array<i64: 4, 1>}, {pipeline_mode = #tpu.pipeline_mode<synchronous>, transform_indices = @transform_8, window_bounds = array<i64: 2, 256>}, {transform_indices = @transform_9, window_bounds = array<i64: 1, 4, 256>}]} {
    %c0 = arith.constant 0 : index
    %c0_0 = arith.constant 0 : index
    %c0_1 = arith.constant 0 : index
    %0 = vector.load %arg1[%c0, %c0_0, %c0_1] : memref<1x4x256xf32, #tpu.memory_space<vmem>>, vector<1x4x256xf32>
    %1 = vector.shape_cast %0 : vector<1x4x256xf32> to vector<4x256xf32>
    %c0_2 = arith.constant 0 : index
    %c0_3 = arith.constant 0 : index
    %2 = vector.load %arg9[%c0_2, %c0_3] : memref<2x256xbf16, #tpu.memory_space<vmem>>, vector<1x256xbf16>
    %c1 = arith.constant 1 : index
    %c0_4 = arith.constant 0 : index
    %3 = vector.load %arg9[%c1, %c0_4] : memref<2x256xbf16, #tpu.memory_space<vmem>>, vector<1x256xbf16>
    %cst = arith.constant 0.000000e+00 : bf16
    %4 = vector.broadcast %cst : bf16 to vector<4x17xbf16>
    %c0_5 = arith.constant 0 : index
    %c0_6 = arith.constant 0 : index
    %5 = vector.load %arg11[%c0_5, %c0_6] : memref<4x290xbf16, #tpu.memory_space<vmem>>, vector<4x17xbf16>
    tpu.vector_store %arg11[%c0_5, %c0_6], %4 {strides = array<i32>} : memref<4x290xbf16, #tpu.memory_space<vmem>>, vector<4x17xbf16>,
    %cst_7 = arith.constant 0.000000e+00 : bf16
    %6 = vector.broadcast %cst_7 : bf16 to vector<4x17xbf16>
    %c0_8 = arith.constant 0 : index
    %c273 = arith.constant 273 : index
    %7 = vector.load %arg11[%c0_8, %c273] : memref<4x290xbf16, #tpu.memory_space<vmem>>, vector<4x17xbf16>
    tpu.vector_store %arg11[%c0_8, %c273], %6 {strides = array<i32>} : memref<4x290xbf16, #tpu.memory_space<vmem>>, vector<4x17xbf16>,
    %c0_9 = arith.constant 0 : index
    %c0_10 = arith.constant 0 : index
    %8 = vector.load %arg4[%c0_9, %c0_10] : memref<4x1xf32, #tpu.memory_space<vmem>>, vector<4x1xf32>
    %9 = vector.broadcast %8 : vector<4x1xf32> to vector<4x256xf32>
    %10 = arith.mulf %1, %9 : vector<4x256xf32>
    %c0_11 = arith.constant 0 : index
    %c0_12 = arith.constant 0 : index
    %11 = vector.load %arg5[%c0_11, %c0_12] : memref<4x1xf32, #tpu.memory_space<vmem>>, vector<4x1xf32>
    %12 = vector.broadcast %11 : vector<4x1xf32> to vector<4x256xf32>
    %13 = arith.addf %10, %12 : vector<4x256xf32>
    %cst_13 = arith.constant 0.000000e+00 : f32
    %14 = vector.broadcast %cst_13 : f32 to vector<4x256xf32>
    %15 = arith.maximumf %13, %14 : vector<4x256xf32>
    %16 = arith.truncf %15 : vector<4x256xf32> to vector<4x256xbf16>
    %c0_14 = arith.constant 0 : index
    %c17 = arith.constant 17 : index
    %17 = vector.load %arg11[%c0_14, %c17] : memref<4x290xbf16, #tpu.memory_space<vmem>>, vector<4x256xbf16>
    tpu.vector_store %arg11[%c0_14, %c17], %16 {strides = array<i32>} : memref<4x290xbf16, #tpu.memory_space<vmem>>, vector<4x256xbf16>,
    %c0_15 = arith.constant 0 : index
    %c0_16 = arith.constant 0 : index
    %18 = vector.load %arg11[%c0_15, %c0_16] : memref<4x290xbf16, #tpu.memory_space<vmem>>, vector<4x256xbf16>
    %19 = vector.broadcast %2 : vector<1x256xbf16> to vector<4x256xbf16>
    %20 = arith.mulf %18, %19 : vector<4x256xbf16>
    %c0_17 = arith.constant 0 : index
    %c1_18 = arith.constant 1 : index
    %21 = vector.load %arg11[%c0_17, %c1_18] : memref<4x290xbf16, #tpu.memory_space<vmem>>, vector<4x256xbf16>
    %c0_19 = arith.constant 0 : index
    %c2 = arith.constant 2 : index
    %22 = vector.load %arg11[%c0_19, %c2] : memref<4x290xbf16, #tpu.memory_space<vmem>>, vector<4x256xbf16>
    %23 = vector.broadcast %3 : vector<1x256xbf16> to vector<4x256xbf16>
    %24 = arith.mulf %22, %23 : vector<4x256xbf16>
    %c0_20 = arith.constant 0 : index
    %c16 = arith.constant 16 : index
    %25 = vector.load %arg11[%c0_20, %c16] : memref<4x290xbf16, #tpu.memory_space<vmem>>, vector<4x256xbf16>
    %26 = vector.broadcast %2 : vector<1x256xbf16> to vector<4x256xbf16>
    %27 = arith.mulf %25, %26 : vector<4x256xbf16>
    %c0_21 = arith.constant 0 : index
    %c17_22 = arith.constant 17 : index
    %28 = vector.load %arg11[%c0_21, %c17_22] : memref<4x290xbf16, #tpu.memory_space<vmem>>, vector<4x256xbf16>
    %c0_23 = arith.constant 0 : index
    %c18 = arith.constant 18 : index
    %29 = vector.load %arg11[%c0_23, %c18] : memref<4x290xbf16, #tpu.memory_space<vmem>>, vector<4x256xbf16>
    %30 = vector.broadcast %3 : vector<1x256xbf16> to vector<4x256xbf16>
    %31 = arith.mulf %29, %30 : vector<4x256xbf16>
    %c0_24 = arith.constant 0 : index
    %c32 = arith.constant 32 : index
    %32 = vector.load %arg11[%c0_24, %c32] : memref<4x290xbf16, #tpu.memory_space<vmem>>, vector<4x256xbf16>
    %33 = vector.broadcast %2 : vector<1x256xbf16> to vector<4x256xbf16>
    %34 = arith.mulf %32, %33 : vector<4x256xbf16>
    %c0_25 = arith.constant 0 : index
    %c33 = arith.constant 33 : index
    %35 = vector.load %arg11[%c0_25, %c33] : memref<4x290xbf16, #tpu.memory_space<vmem>>, vector<4x256xbf16>
    %c0_26 = arith.constant 0 : index
    %c34 = arith.constant 34 : index
    %36 = vector.load %arg11[%c0_26, %c34] : memref<4x290xbf16, #tpu.memory_space<vmem>>, vector<4x256xbf16>
    %37 = vector.broadcast %3 : vector<1x256xbf16> to vector<4x256xbf16>
    %38 = arith.mulf %36, %37 : vector<4x256xbf16>
    %39 = tpu.concatenate %20, %21, %24, %27, %28, %31, %34, %35, %38 in 0 : vector<4x256xbf16>, vector<4x256xbf16>, vector<4x256xbf16>, vector<4x256xbf16>, vector<4x256xbf16>, vector<4x256xbf16>, vector<4x256xbf16>, vector<4x256xbf16>, vector<4x256xbf16> -> vector<36x256xbf16>
    %c0_27 = arith.constant 0 : index
    %c0_28 = arith.constant 0 : index
    %40 = vector.load %arg2[%c0_27, %c0_28] : memref<4x36xbf16, #tpu.memory_space<vmem>>, vector<4x36xbf16>
    %cst_29 = arith.constant dense<0.000000e+00> : vector<4x256xf32>
    %41 = tpu.matmul %40, %39, %cst_29 {dimension_numbers = #tpu.dot_dimension_numbers<[1], [0], [0], [1], [0, 0, 1, 1], [], []>} : vector<4x36xbf16>, vector<36x256xbf16>, vector<4x256xf32> -> vector<4x256xf32>
    %c0_30 = arith.constant 0 : index
    %c0_31 = arith.constant 0 : index
    %42 = vector.load %arg6[%c0_30, %c0_31] : memref<4x1xf32, #tpu.memory_space<vmem>>, vector<4x1xf32>
    %43 = vector.broadcast %42 : vector<4x1xf32> to vector<4x256xf32>
    %44 = arith.mulf %41, %43 : vector<4x256xf32>
    %c0_32 = arith.constant 0 : index
    %c0_33 = arith.constant 0 : index
    %45 = vector.load %arg7[%c0_32, %c0_33] : memref<4x1xf32, #tpu.memory_space<vmem>>, vector<4x1xf32>
    %46 = vector.broadcast %45 : vector<4x1xf32> to vector<4x256xf32>
    %47 = arith.addf %44, %46 : vector<4x256xf32>
    %cst_34 = arith.constant 0.000000e+00 : f32
    %48 = vector.broadcast %cst_34 : f32 to vector<4x256xf32>
    %49 = arith.maximumf %47, %48 : vector<4x256xf32>
    %50 = arith.truncf %49 : vector<4x256xf32> to vector<4x256xbf16>
    %c0_35 = arith.constant 0 : index
    %c17_36 = arith.constant 17 : index
    %51 = vector.load %arg11[%c0_35, %c17_36] : memref<4x290xbf16, #tpu.memory_space<vmem>>, vector<4x256xbf16>
    tpu.vector_store %arg11[%c0_35, %c17_36], %50 {strides = array<i32>} : memref<4x290xbf16, #tpu.memory_space<vmem>>, vector<4x256xbf16>,
    %c0_37 = arith.constant 0 : index
    %c0_38 = arith.constant 0 : index
    %52 = vector.load %arg11[%c0_37, %c0_38] : memref<4x290xbf16, #tpu.memory_space<vmem>>, vector<4x256xbf16>
    %53 = vector.broadcast %2 : vector<1x256xbf16> to vector<4x256xbf16>
    %54 = arith.mulf %52, %53 : vector<4x256xbf16>
    %c0_39 = arith.constant 0 : index
    %c1_40 = arith.constant 1 : index
    %55 = vector.load %arg11[%c0_39, %c1_40] : memref<4x290xbf16, #tpu.memory_space<vmem>>, vector<4x256xbf16>
    %c0_41 = arith.constant 0 : index
    %c2_42 = arith.constant 2 : index
    %56 = vector.load %arg11[%c0_41, %c2_42] : memref<4x290xbf16, #tpu.memory_space<vmem>>, vector<4x256xbf16>
    %57 = vector.broadcast %3 : vector<1x256xbf16> to vector<4x256xbf16>
    %58 = arith.mulf %56, %57 : vector<4x256xbf16>
    %c0_43 = arith.constant 0 : index
    %c16_44 = arith.constant 16 : index
    %59 = vector.load %arg11[%c0_43, %c16_44] : memref<4x290xbf16, #tpu.memory_space<vmem>>, vector<4x256xbf16>
    %60 = vector.broadcast %2 : vector<1x256xbf16> to vector<4x256xbf16>
    %61 = arith.mulf %59, %60 : vector<4x256xbf16>
    %c0_45 = arith.constant 0 : index
    %c17_46 = arith.constant 17 : index
    %62 = vector.load %arg11[%c0_45, %c17_46] : memref<4x290xbf16, #tpu.memory_space<vmem>>, vector<4x256xbf16>
    %c0_47 = arith.constant 0 : index
    %c18_48 = arith.constant 18 : index
    %63 = vector.load %arg11[%c0_47, %c18_48] : memref<4x290xbf16, #tpu.memory_space<vmem>>, vector<4x256xbf16>
    %64 = vector.broadcast %3 : vector<1x256xbf16> to vector<4x256xbf16>
    %65 = arith.mulf %63, %64 : vector<4x256xbf16>
    %c0_49 = arith.constant 0 : index
    %c32_50 = arith.constant 32 : index
    %66 = vector.load %arg11[%c0_49, %c32_50] : memref<4x290xbf16, #tpu.memory_space<vmem>>, vector<4x256xbf16>
    %67 = vector.broadcast %2 : vector<1x256xbf16> to vector<4x256xbf16>
    %68 = arith.mulf %66, %67 : vector<4x256xbf16>
    %c0_51 = arith.constant 0 : index
    %c33_52 = arith.constant 33 : index
    %69 = vector.load %arg11[%c0_51, %c33_52] : memref<4x290xbf16, #tpu.memory_space<vmem>>, vector<4x256xbf16>
    %c0_53 = arith.constant 0 : index
    %c34_54 = arith.constant 34 : index
    %70 = vector.load %arg11[%c0_53, %c34_54] : memref<4x290xbf16, #tpu.memory_space<vmem>>, vector<4x256xbf16>
    %71 = vector.broadcast %3 : vector<1x256xbf16> to vector<4x256xbf16>
    %72 = arith.mulf %70, %71 : vector<4x256xbf16>
    %73 = tpu.concatenate %54, %55, %58, %61, %62, %65, %68, %69, %72 in 0 : vector<4x256xbf16>, vector<4x256xbf16>, vector<4x256xbf16>, vector<4x256xbf16>, vector<4x256xbf16>, vector<4x256xbf16>, vector<4x256xbf16>, vector<4x256xbf16>, vector<4x256xbf16> -> vector<36x256xbf16>
    %c0_55 = arith.constant 0 : index
    %c0_56 = arith.constant 0 : index
    %74 = vector.load %arg3[%c0_55, %c0_56] : memref<4x36xbf16, #tpu.memory_space<vmem>>, vector<4x36xbf16>
    %cst_57 = arith.constant dense<0.000000e+00> : vector<4x256xf32>
    %75 = tpu.matmul %74, %73, %cst_57 {dimension_numbers = #tpu.dot_dimension_numbers<[1], [0], [0], [1], [0, 0, 1, 1], [], []>} : vector<4x36xbf16>, vector<36x256xbf16>, vector<4x256xf32> -> vector<4x256xf32>
    %c0_58 = arith.constant 0 : index
    %c0_59 = arith.constant 0 : index
    %76 = vector.load %arg8[%c0_58, %c0_59] : memref<4x1xf32, #tpu.memory_space<vmem>>, vector<4x1xf32>
    %77 = vector.broadcast %76 : vector<4x1xf32> to vector<4x256xf32>
    %78 = arith.addf %75, %77 : vector<4x256xf32>
    %79 = arith.addf %1, %78 : vector<4x256xf32>
    %c0_60 = arith.constant 0 : index
    %c0_61 = arith.constant 0 : index
    %c0_62 = arith.constant 0 : index
    %80 = vector.load %arg10[%c0_60, %c0_61, %c0_62] : memref<1x4x256xf32, #tpu.memory_space<vmem>>, vector<1x4x256xf32>
    %81 = vector.shape_cast %80 : vector<1x4x256xf32> to vector<4x256xf32>
    %82 = vector.shape_cast %79 : vector<4x256xf32> to vector<1x4x256xf32>
    tpu.vector_store %arg10[%c0_60, %c0_61, %c0_62], %82 {strides = array<i32>} : memref<1x4x256xf32, #tpu.memory_space<vmem>>, vector<1x4x256xf32>,
    return
  }
  func.func @transform_0(%arg0: i32) -> (i32, i32, i32) {
    %c0_i32 = arith.constant 0 : i32
    %c0_i32_0 = arith.constant 0 : i32
    %c0_i32_1 = arith.constant 0 : i32
    return %arg0, %c0_i32, %c0_i32_0 : i32, i32, i32
  }
  func.func @transform_1(%arg0: i32) -> (i32, i32) {
    %c0_i32 = arith.constant 0 : i32
    %c0_i32_0 = arith.constant 0 : i32
    %c0_i32_1 = arith.constant 0 : i32
    return %c0_i32, %c0_i32_0 : i32, i32
  }
  func.func @transform_2(%arg0: i32) -> (i32, i32) {
    %c0_i32 = arith.constant 0 : i32
    %c0_i32_0 = arith.constant 0 : i32
    %c0_i32_1 = arith.constant 0 : i32
    return %c0_i32, %c0_i32_0 : i32, i32
  }
  func.func @transform_3(%arg0: i32) -> (i32, i32) {
    %c0_i32 = arith.constant 0 : i32
    %c0_i32_0 = arith.constant 0 : i32
    %c0_i32_1 = arith.constant 0 : i32
    return %c0_i32, %c0_i32_0 : i32, i32
  }
  func.func @transform_4(%arg0: i32) -> (i32, i32) {
    %c0_i32 = arith.constant 0 : i32
    %c0_i32_0 = arith.constant 0 : i32
    %c0_i32_1 = arith.constant 0 : i32
    return %c0_i32, %c0_i32_0 : i32, i32
  }
  func.func @transform_5(%arg0: i32) -> (i32, i32) {
    %c0_i32 = arith.constant 0 : i32
    %c0_i32_0 = arith.constant 0 : i32
    %c0_i32_1 = arith.constant 0 : i32
    return %c0_i32, %c0_i32_0 : i32, i32
  }
  func.func @transform_6(%arg0: i32) -> (i32, i32) {
    %c0_i32 = arith.constant 0 : i32
    %c0_i32_0 = arith.constant 0 : i32
    %c0_i32_1 = arith.constant 0 : i32
    return %c0_i32, %c0_i32_0 : i32, i32
  }
  func.func @transform_7(%arg0: i32) -> (i32, i32) {
    %c0_i32 = arith.constant 0 : i32
    %c0_i32_0 = arith.constant 0 : i32
    %c0_i32_1 = arith.constant 0 : i32
    return %c0_i32, %c0_i32_0 : i32, i32
  }
  func.func @transform_8(%arg0: i32) -> (i32, i32) {
    %c0_i32 = arith.constant 0 : i32
    %c0_i32_0 = arith.constant 0 : i32
    %c0_i32_1 = arith.constant 0 : i32
    return %c0_i32, %c0_i32_0 : i32, i32
  }
  func.func @transform_9(%arg0: i32) -> (i32, i32, i32) {
    %c0_i32 = arith.constant 0 : i32
    %c0_i32_0 = arith.constant 0 : i32
    %c0_i32_1 = arith.constant 0 : i32
    return %arg0, %c0_i32, %c0_i32_0 : i32, i32, i32
  }
}

</mosaic_0001>

<llo_original>
// kernel: tpu_custom_call.1
$region0: #{tpu_custom_call.1}
  #allocation0 [shape = 'u32[]', space=smem, size = 0x4, offset = 0x4, fixed_abs, tag = 'smem constant byte address 0x4 - core index']
  #allocation1 [shape = 'u32[144,128]{1,0:T(1,128)}', space=vmem, size = 0x12000, scoped, tag = 'internal scratch']
  #allocation2 [shape = 'bf16[4,290]{1,0:T(4,128)(2,1)}', space=vmem, size = 0xc00, scoped, tag = 'scratch operand']
  %s0 = inlined_call_operand.vmem [shape: f32[2,4,256], index: 0, kind: input, shape index: {}]
  %s1 = inlined_call_operand.vmem [shape: bf16[4,36], index: 1, kind: input, shape index: {}]
  %s2 = inlined_call_operand.vmem [shape: bf16[4,36], index: 2, kind: input, shape index: {}]
  %s3 = inlined_call_operand.vmem [shape: f32[4,1], index: 3, kind: input, shape index: {}]
  %s4 = inlined_call_operand.vmem [shape: f32[4,1], index: 4, kind: input, shape index: {}]
  %s5 = inlined_call_operand.vmem [shape: f32[4,1], index: 5, kind: input, shape index: {}]
  %s6 = inlined_call_operand.vmem [shape: f32[4,1], index: 6, kind: input, shape index: {}]
  %s7 = inlined_call_operand.vmem [shape: f32[4,1], index: 7, kind: input, shape index: {}]
  %s8 = inlined_call_operand.vmem [shape: bf16[2,256], index: 8, kind: input, shape index: {}]
  %s9 = inlined_call_operand.hbm [shape: f32[2,4,256], index: 9, kind: output, shape index: {}]
  %s10 = sld [smem:[#allocation0]]
  $region69: #{tpu_custom_call.1} parent=0
    _
  %s12 = ssub.s32 1, %s10
  %s13 = scalar_select 0, %s12, %s10
  $region1: #{tpu_custom_call.1} parent=0
    #allocation3 [shape = 'u8[8192]{0}', space=vmem, size = 0x2000, scoped, tag = 'output window, operand 0']
    #allocation4 [shape = 's32[2]{0}', space=sflag, size = 0x8, scoped, tag = 'scoped memory for tpu_custom_call.1']
    %14 = vsyncpa [#allocation4], 0
    %s15 = scalar_lea.sflag [#allocation4], 1
    %16 = vsyncpa %s15, 0
    loop: start=0, step=1, limit=4
    $region2: #{tpu_custom_call.1} parent=1 // loop_pre_header
      _
    $region3: #{tpu_custom_call.1} parent=1 // loop_header
      %s18 = sphi 0, %s22
      %p19 = scmp.ge.s32.totalorder %s18, 4
      %s28 = sphi 0, %s30
      %s31 = sphi 0, %s28
      %s32 = sphi 0, %s31
      %s48 = sphi 0, %s32
      %s52 = sphi 0, %s52
      %s54 = sphi 0, %s52
      %s55 = sphi 0, %s54
      %s69 = sphi 0, %s55
      %s73 = sphi 0, %s73
      %s75 = sphi 0, %s73
      %s76 = sphi 0, %s75
      %s90 = sphi 0, %s76
      %s94 = sphi 0, %s94
      %s96 = sphi 0, %s94
      %s97 = sphi 0, %s96
      %s111 = sphi 0, %s97
      %s115 = sphi 0, %s115
      %s117 = sphi 0, %s115
      %s118 = sphi 0, %s117
      %s132 = sphi 0, %s118
      %s136 = sphi 0, %s136
      %s138 = sphi 0, %s136
      %s139 = sphi 0, %s138
      %s153 = sphi 0, %s139
      %s157 = sphi 0, %s157
      %s159 = sphi 0, %s157
      %s160 = sphi 0, %s159
      %s174 = sphi 0, %s160
      %s178 = sphi 0, %s178
      %s180 = sphi 0, %s178
      %s181 = sphi 0, %s180
      %s195 = sphi 0, %s181
      %s199 = sphi 0, %s199
      %s201 = sphi 0, %s199
      %s202 = sphi 0, %s201
      %s216 = sphi 0, %s202
      %s222 = sphi 0, %s224
      %s225 = sphi 0, %s222
      %s226 = sphi 0, %s225
      %s242 = sphi 0, %s226
    $region4: #{tpu_custom_call.1} parent=1 // loop_header_branch
      %21 = sbr.rel (%p19) target = $region8
    $region5: #{tpu_custom_call.1} parent=1 // loop_body
      %s23 = ssub.s32 %s18, 1
      %s24 = ssub.s32 %s18, 2
      %s25 = sadd.s32 %s18, 1
      %s26 = ssub.s32 %s18, %s25
      %p27 = scmp.eq.s32.totalorder %s26, 0
      %s29 = sadd.s32 %s28, 1
      %s30 = scalar_select %p27, %s28, %s29
      %p33 = pneg %p27
      %p34 = scmp.eq.s32.totalorder %s18, 1
      %p35 = por %p33, %p34
      %p36 = scmp.ne.s32.totalorder %s28, %s31
      %p37 = scmp.eq.s32.totalorder %s18, 0
      %p38 = por %p36, %p37
      %p39 = scmp.ne.s32.totalorder %s28, %s31
      %p40 = scmp.eq.s32.totalorder %s23, 1
      %p41 = por %p39, %p40
      %p42 = scmp.ne.s32.totalorder %s31, %s32
      %p43 = scmp.eq.s32.totalorder %s23, 0
      %p44 = por %p42, %p43
      %p45 = scmp.ne.s32.totalorder %s31, %s32
      %p46 = scmp.eq.s32.totalorder %s24, 1
      %p47 = por %p45, %p46
      %p49 = scmp.ne.s32.totalorder %s32, %s48
      %p50 = scmp.eq.s32.totalorder %s24, 0
      %p51 = por %p49, %p50
      %s53 = sadd.s32 %s52, 1
      %p56 = scmp.eq.s32.totalorder %s18, 1
      %p57 = scmp.ne.s32.totalorder %s52, %s54
      %p58 = scmp.eq.s32.totalorder %s18, 0
      %p59 = por %p57, %p58
      %p60 = scmp.ne.s32.totalorder %s52, %s54
      %p61 = scmp.eq.s32.totalorder %s23, 1
      %p62 = por %p60, %p61
      %p63 = scmp.ne.s32.totalorder %s54, %s55
      %p64 = scmp.eq.s32.totalorder %s23, 0
      %p65 = por %p63, %p64
      %p66 = scmp.ne.s32.totalorder %s54, %s55
      %p67 = scmp.eq.s32.totalorder %s24, 1
      %p68 = por %p66, %p67
      %p70 = scmp.ne.s32.totalorder %s55, %s69
      %p71 = scmp.eq.s32.totalorder %s24, 0
      %p72 = por %p70, %p71
      %s74 = sadd.s32 %s73, 1
      %p77 = scmp.eq.s32.totalorder %s18, 1
      %p78 = scmp.ne.s32.totalorder %s73, %s75
      %p79 = scmp.eq.s32.totalorder %s18, 0
      %p80 = por %p78, %p79
      %p81 = scmp.ne.s32.totalorder %s73, %s75
      %p82 = scmp.eq.s32.totalorder %s23, 1
      %p83 = por %p81, %p82
      %p84 = scmp.ne.s32.totalorder %s75, %s76
      %p85 = scmp.eq.s32.totalorder %s23, 0
      %p86 = por %p84, %p85
      %p87 = scmp.ne.s32.totalorder %s75, %s76
      %p88 = scmp.eq.s32.totalorder %s24, 1
      %p89 = por %p87, %p88
      %p91 = scmp.ne.s32.totalorder %s76, %s90
      %p92 = scmp.eq.s32.totalorder %s24, 0
      %p93 = por %p91, %p92
      %s95 = sadd.s32 %s94, 1
      %p98 = scmp.eq.s32.totalorder %s18, 1
      %p99 = scmp.ne.s32.totalorder %s94, %s96
      %p100 = scmp.eq.s32.totalorder %s18, 0
      %p101 = por %p99, %p100
      %p102 = scmp.ne.s32.totalorder %s94, %s96
      %p103 = scmp.eq.s32.totalorder %s23, 1
      %p104 = por %p102, %p103
      %p105 = scmp.ne.s32.totalorder %s96, %s97
      %p106 = scmp.eq.s32.totalorder %s23, 0
      %p107 = por %p105, %p106
      %p108 = scmp.ne.s32.totalorder %s96, %s97
      %p109 = scmp.eq.s32.totalorder %s24, 1
      %p110 = por %p108, %p109
      %p112 = scmp.ne.s32.totalorder %s97, %s111
      %p113 = scmp.eq.s32.totalorder %s24, 0
      %p114 = por %p112, %p113
      %s116 = sadd.s32 %s115, 1
      %p119 = scmp.eq.s32.totalorder %s18, 1
      %p120 = scmp.ne.s32.totalorder %s115, %s117
      %p121 = scmp.eq.s32.totalorder %s18, 0
      %p122 = por %p120, %p121
      %p123 = scmp.ne.s32.totalorder %s115, %s117
      %p124 = scmp.eq.s32.totalorder %s23, 1
      %p125 = por %p123, %p124
      %p126 = scmp.ne.s32.totalorder %s117, %s118
      %p127 = scmp.eq.s32.totalorder %s23, 0
      %p128 = por %p126, %p127
      %p129 = scmp.ne.s32.totalorder %s117, %s118
      %p130 = scmp.eq.s32.totalorder %s24, 1
      %p131 = por %p129, %p130
      %p133 = scmp.ne.s32.totalorder %s118, %s132
      %p134 = scmp.eq.s32.totalorder %s24, 0
      %p135 = por %p133, %p134
      %s137 = sadd.s32 %s136, 1
      %p140 = scmp.eq.s32.totalorder %s18, 1
      %p141 = scmp.ne.s32.totalorder %s136, %s138
      %p142 = scmp.eq.s32.totalorder %s18, 0
      %p143 = por %p141, %p142
      %p144 = scmp.ne.s32.totalorder %s136, %s138
      %p145 = scmp.eq.s32.totalorder %s23, 1
      %p146 = por %p144, %p145
      %p147 = scmp.ne.s32.totalorder %s138, %s139
      %p148 = scmp.eq.s32.totalorder %s23, 0
      %p149 = por %p147, %p148
      %p150 = scmp.ne.s32.totalorder %s138, %s139
      %p151 = scmp.eq.s32.totalorder %s24, 1
      %p152 = por %p150, %p151
      %p154 = scmp.ne.s32.totalorder %s139, %s153
      %p155 = scmp.eq.s32.totalorder %s24, 0
      %p156 = por %p154, %p155
      %s158 = sadd.s32 %s157, 1
      %p161 = scmp.eq.s32.totalorder %s18, 1
      %p162 = scmp.ne.s32.totalorder %s157, %s159
      %p163 = scmp.eq.s32.totalorder %s18, 0
      %p164 = por %p162, %p163
      %p165 = scmp.ne.s32.totalorder %s157, %s159
      %p166 = scmp.eq.s32.totalorder %s23, 1
      %p167 = por %p165, %p166
      %p168 = scmp.ne.s32.totalorder %s159, %s160
      %p169 = scmp.eq.s32.totalorder %s23, 0
      %p170 = por %p168, %p169
      %p171 = scmp.ne.s32.totalorder %s159, %s160
      %p172 = scmp.eq.s32.totalorder %s24, 1
      %p173 = por %p171, %p172
      %p175 = scmp.ne.s32.totalorder %s160, %s174
      %p176 = scmp.eq.s32.totalorder %s24, 0
      %p177 = por %p175, %p176
      %s179 = sadd.s32 %s178, 1
      %p182 = scmp.eq.s32.totalorder %s18, 1
      %p183 = scmp.ne.s32.totalorder %s178, %s180
      %p184 = scmp.eq.s32.totalorder %s18, 0
      %p185 = por %p183, %p184
      %p186 = scmp.ne.s32.totalorder %s178, %s180
      %p187 = scmp.eq.s32.totalorder %s23, 1
      %p188 = por %p186, %p187
      %p189 = scmp.ne.s32.totalorder %s180, %s181
      %p190 = scmp.eq.s32.totalorder %s23, 0
      %p191 = por %p189, %p190
      %p192 = scmp.ne.s32.totalorder %s180, %s181
      %p193 = scmp.eq.s32.totalorder %s24, 1
      %p194 = por %p192, %p193
      %p196 = scmp.ne.s32.totalorder %s181, %s195
      %p197 = scmp.eq.s32.totalorder %s24, 0
      %p198 = por %p196, %p197
      %s200 = sadd.s32 %s199, 1
      %p203 = scmp.eq.s32.totalorder %s18, 1
      %p204 = scmp.ne.s32.totalorder %s199, %s201
      %p205 = scmp.eq.s32.totalorder %s18, 0
      %p206 = por %p204, %p205
      %p207 = scmp.ne.s32.totalorder %s199, %s201
      %p208 = scmp.eq.s32.totalorder %s23, 1
      %p209 = por %p207, %p208
      %p210 = scmp.ne.s32.totalorder %s201, %s202
      %p211 = scmp.eq.s32.totalorder %s23, 0
      %p212 = por %p210, %p211
      %p213 = scmp.ne.s32.totalorder %s201, %s202
      %p214 = scmp.eq.s32.totalorder %s24, 1
      %p215 = por %p213, %p214
      %p217 = scmp.ne.s32.totalorder %s202, %s216
      %p218 = scmp.eq.s32.totalorder %s24, 0
      %p219 = por %p217, %p218
      %s220 = ssub.s32 %s18, %s25
      %p221 = scmp.eq.s32.totalorder %s220, 0
      %s223 = sadd.s32 %s222, 1
      %s224 = scalar_select %p221, %s222, %s223
      %p227 = pneg %p221
      %p228 = scmp.eq.s32.totalorder %s18, 1
      %p229 = por %p227, %p228
      %p230 = scmp.ne.s32.totalorder %s222, %s225
      %p231 = scmp.eq.s32.totalorder %s18, 0
      %p232 = por %p230, %p231
      %p233 = scmp.ne.s32.totalorder %s222, %s225
      %p234 = scmp.eq.s32.totalorder %s23, 1
      %p235 = por %p233, %p234
      %p236 = scmp.ne.s32.totalorder %s225, %s226
      %p237 = scmp.eq.s32.totalorder %s23, 0
      %p238 = por %p236, %p237
      %p239 = scmp.ne.s32.totalorder %s225, %s226
      %p240 = scmp.eq.s32.totalorder %s24, 1
      %p241 = por %p239, %p240
      %p243 = scmp.ne.s32.totalorder %s226, %s242
      %p244 = scmp.eq.s32.totalorder %s24, 0
      %p245 = por %p243, %p244
      %p246 = scmp.le.s32.totalorder 1, %s18
      %p247 = scmp.lt.s32.totalorder %s18, 3
      %p248 = pnand %p246, %p247
      %p249 = pneg %p248
      // Predicated region
      $region9: #{tpu_custom_call.1} parent=5 // pred_check
        _
      $region10: #{tpu_custom_call.1} parent=5 // pred_check_branch
        %251 = sbr.rel (%p248) target = $region12
      $region11: #{tpu_custom_call.1} parent=5 // pred_region
        %s252 = ssub.s32 %s18, 1
        // Predicated region
        $region13: #{tpu_custom_call.1} parent=11 // pred_check
          %p253 = pneg %p65
        $region14: #{tpu_custom_call.1} parent=11 // pred_check_branch
          %255 = sbr.rel (%p253) target = $region16
        $region15: #{tpu_custom_call.1} parent=11 // pred_region
          _
        $region16: #{tpu_custom_call.1} parent=11 // pred_fallthru
          _
        // Predicated region
        $region17: #{tpu_custom_call.1} parent=11 // pred_check
          %p256 = pneg %p86
        $region18: #{tpu_custom_call.1} parent=11 // pred_check_branch
          %258 = sbr.rel (%p256) target = $region20
        $region19: #{tpu_custom_call.1} parent=11 // pred_region
          _
        $region20: #{tpu_custom_call.1} parent=11 // pred_fallthru
          _
        // Predicated region
        $region21: #{tpu_custom_call.1} parent=11 // pred_check
          %p259 = pneg %p107
        $region22: #{tpu_custom_call.1} parent=11 // pred_check_branch
          %261 = sbr.rel (%p259) target = $region24
        $region23: #{tpu_custom_call.1} parent=11 // pred_region
          _
        $region24: #{tpu_custom_call.1} parent=11 // pred_fallthru
          _
        // Predicated region
        $region25: #{tpu_custom_call.1} parent=11 // pred_check
          %p262 = pneg %p128
        $region26: #{tpu_custom_call.1} parent=11 // pred_check_branch
          %264 = sbr.rel (%p262) target = $region28
        $region27: #{tpu_custom_call.1} parent=11 // pred_region
          _
        $region28: #{tpu_custom_call.1} parent=11 // pred_fallthru
          _
        // Predicated region
        $region29: #{tpu_custom_call.1} parent=11 // pred_check
          %p265 = pneg %p149
        $region30: #{tpu_custom_call.1} parent=11 // pred_check_branch
          %267 = sbr.rel (%p265) target = $region32
        $region31: #{tpu_custom_call.1} parent=11 // pred_region
          _
        $region32: #{tpu_custom_call.1} parent=11 // pred_fallthru
          _
        // Predicated region
        $region33: #{tpu_custom_call.1} parent=11 // pred_check
          %p268 = pneg %p170
        $region34: #{tpu_custom_call.1} parent=11 // pred_check_branch
          %270 = sbr.rel (%p268) target = $region36
        $region35: #{tpu_custom_call.1} parent=11 // pred_region
          _
        $region36: #{tpu_custom_call.1} parent=11 // pred_fallthru
          _
        // Predicated region
        $region37: #{tpu_custom_call.1} parent=11 // pred_check
          %p271 = pneg %p191
        $region38: #{tpu_custom_call.1} parent=11 // pred_check_branch
          %273 = sbr.rel (%p271) target = $region40
        $region39: #{tpu_custom_call.1} parent=11 // pred_region
          _
        $region40: #{tpu_custom_call.1} parent=11 // pred_fallthru
          _
        // Predicated region
        $region41: #{tpu_custom_call.1} parent=11 // pred_check
          %p274 = pneg %p212
        $region42: #{tpu_custom_call.1} parent=11 // pred_check_branch
          %276 = sbr.rel (%p274) target = $region44
        $region43: #{tpu_custom_call.1} parent=11 // pred_region
          _
        $region44: #{tpu_custom_call.1} parent=11 // pred_fallthru
          _
      $region12: #{tpu_custom_call.1} parent=5 // pred_fallthru
        _
      %p277 = scmp.lt.s32.totalorder %s18, 2
      // Predicated region
      $region45: #{tpu_custom_call.1} parent=5 // pred_check
        %p278 = pneg %p277
      $region46: #{tpu_custom_call.1} parent=5 // pred_check_branch
        %280 = sbr.rel (%p278) target = $region48
      $region47: #{tpu_custom_call.1} parent=5 // pred_region
        // Predicated region
        $region49: #{tpu_custom_call.1} parent=47 // pred_check
          %p281 = pneg %p38
        $region50: #{tpu_custom_call.1} parent=47 // pred_check_branch
          %283 = sbr.rel (%p281) target = $region52
        $region51: #{tpu_custom_call.1} parent=47 // pred_region
          %p284 = scmp.lt.s32.totalorder %s18, 1
          %s285 = scalar_select %p284, %s18, 1
          %s286 = smul.addr %s285, 2
          %s287 = smul.addr %s286, 4
          %s288 = scalar_lea.vmem %s0, %s287
        $region52: #{tpu_custom_call.1} parent=47 // pred_fallthru
          _
      $region48: #{tpu_custom_call.1} parent=5 // pred_fallthru
        _
      %p289 = scmp.le.s32.totalorder 1, %s18
      %p290 = scmp.lt.s32.totalorder %s18, 3
      %p291 = pnand %p289, %p290
      %p292 = pneg %p291
      // Predicated region
      $region53: #{tpu_custom_call.1} parent=5 // pred_check
        _
      $region54: #{tpu_custom_call.1} parent=5 // pred_check_branch
        %294 = sbr.rel (%p291) target = $region56
      $region55: #{tpu_custom_call.1} parent=5 // pred_region
        %s295 = ssub.s32 %s18, 1
        %p296 = scmp.lt.s32.totalorder %s23, 1
        %s297 = scalar_select %p296, %s23, 1
        %s298 = smul.addr %s297, 2
        %s299 = smul.addr %s298, 4
        %s300 = scalar_lea.vmem %s0, %s299
        %p301 = pneg %p44
        %p302 = pneg %p41
        %p303 = pneg %p65
        %p304 = pneg %p62
        %p305 = pneg %p86
        %p306 = pneg %p83
        %p307 = pneg %p107
        %p308 = pneg %p104
        %p309 = pneg %p128
        %p310 = pneg %p125
        %p311 = pneg %p149
        %p312 = pneg %p146
        %p313 = pneg %p170
        %p314 = pneg %p167
        %p315 = pneg %p191
        %p316 = pneg %p188
        %p317 = pneg %p212
        %p318 = pneg %p209
        %p319 = pneg %p238
        %p320 = pneg %p235
        %s321 = sand.u32 %s225, 1
        %s322 = scalar_lea.sflag [#allocation4], %s321
        %s323 = sand.u32 %s225, 1
        %s324 = smul.addr %s323, 8
        %s325 = scalar_lea.vmem [#allocation3], %s324
        %p326 = scmp.lt.s32.totalorder %s23, 1
        %s327 = scalar_select %p326, %s23, 1
        %s328 = smul.addr %s327, 2
        %s329 = smul.addr %s328, 4
        %s330 = scalar_lea.vmem %s0, %s329
        %v332 = vld [vmem:[%s330] sm:$0xff]
        %v333 = vld [vmem:[%s8] sm:$0x3]
        %vm334 = vcmask 132096
        %335 = vst.msk [vmem:[#allocation2] sm:$0x3] %vm334, 0
        %vm336 = vcmask 271496
        %337 = vst.msk [vmem:[#allocation2 + $0x4] sm:$0x3] %vm336, 0
        %v338 = vld [vmem:[%s3] sm:$0xf]
        %340 = vset.pattern.permute.xlu0 0
        %341 = vperm.xlu0 %340, %v338
        %v342 = vpop.permute.xlu0 %341
        %v344 = vunpack.c.l.s4 839922192
        %v345 = vunpack.c.0.s8 %v344
        %v346 = vlaneseq
        %v347 = vshrl.u32 %v346, 7
        %v348 = vsub.s32 %v345, %v347
        %v349 = vrot.slane %v342, %v348
        %v351 = vmul.f32 %v332, %v349
        %v352 = vld [vmem:[%s4] sm:$0xf]
        %354 = vset.pattern.permute.xlu0 0
        %355 = vperm.xlu0 %354, %v352
        %v356 = vpop.permute.xlu0 %355
        %v358 = vunpack.c.l.s4 839922192
        %v359 = vunpack.c.0.s8 %v358
        %v360 = vlaneseq
        %v361 = vshrl.u32 %v360, 7
        %v362 = vsub.s32 %v359, %v361
        %v363 = vrot.slane %v356, %v362
        %v365 = vadd.f32 %v351, %v363
        %v366 = vmax.f32 %v365, 0.0
        %v368 = vcombine.high %v366, %v366
        %v370 = vpack.c.bf16 %v366, %v366
        %v371 = vpack.c.bf16 %v368, %v368
        %v374 = vcombine.low %v370, %v371
        %v376 = vunpack.c.l.s4 1983009808
        %v377 = vunpack.c.0.s8 %v376
        %v378 = vlaneseq
        %v379 = vshrl.u32 %v378, 7
        %v380 = vsub.s32 %v377, %v379
        %v381 = vrot.slane %v374, %v380
        %382 = vrot.lane.b32.xlu0 %v381, 17
        %v383 = vpop.permute.xlu0 %382
        %v384 = vrot.slane %v383, 6
        %vm385 = vcmask 138240
        %v386 = vsel %vm385, %v384, %v383
        %vm388 = vcmask 1041544
        %vm389 = vcmask 1043458
        %vm390 = vmor %vm389, %vm388
        %vm391 = vcmask 136196
        %vm392 = vmor %vm391, %vm390
        %393 = vst.msk [vmem:[#allocation2] sm:$0x3f] %vm392, %v386
        %v394 = vld [vmem:[#allocation2] sm:$0xf]
        %v397 = vunpack.c.l.s4 1966171168
        %v398 = vunpack.c.0.s8 %v397
        %v399 = vlaneseq
        %v400 = vshrl.u32 %v399, 7
        %v401 = vsub.s32 %v398, %v400
        %v402 = vrot.slane %v333, %v401
        %v403 = vcombine.high %v402, %v402
        %v405 = vunpack.c.l.s4 1966171168
        %v406 = vunpack.c.0.s8 %v405
        %v407 = vlaneseq
        %v408 = vshrl.u32 %v407, 7
        %v409 = vsub.s32 %v406, %v408
        %v410 = vrot.slane %v402, %v409
        %v412 = vunpack.c.l.s4 1966171168
        %v413 = vunpack.c.0.s8 %v412
        %v414 = vlaneseq
        %v415 = vshrl.u32 %v414, 7
        %v416 = vsub.s32 %v413, %v415
        %v417 = vrot.slane %v403, %v416
        %v419 = vpack.i.b16 %v410, %v410
        %v421 = vlaneseq
        %v422 = vshrl.u32 %v421, 7
        %v423 = vsub.s32 0, %v422
        %v424 = vrot.slane %v419, %v423
        %v426 = vpack.i.b16 %v417, %v417
        %v428 = vlaneseq
        %v429 = vshrl.u32 %v428, 7
        %v430 = vsub.s32 0, %v429
        %v431 = vrot.slane %v426, %v430
        %v434 = vcombine.low %v424, %v431
        %v436 = vunpack.c.l.s4 1983009808
        %v437 = vunpack.c.0.s8 %v436
        %v438 = vlaneseq
        %v439 = vshrl.u32 %v438, 7
        %v440 = vsub.s32 %v437, %v439
        %v441 = vrot.slane %v434, %v440
        %v443 = vmul.bf16 %v394, %v441
        %v444 = vld [vmem:[#allocation2] sm:$0x3f]
        %v445 = vshrl.u32 %v410, 16
        %v446 = vpack.i.b16 %v445, %v445
        %v448 = vlaneseq
        %v449 = vshrl.u32 %v448, 7
        %v450 = vsub.s32 0, %v449
        %v451 = vrot.slane %v446, %v450
        %v452 = vshrl.u32 %v417, 16
        %v453 = vpack.i.b16 %v452, %v452
        %v455 = vlaneseq
        %v456 = vshrl.u32 %v455, 7
        %v457 = vsub.s32 0, %v456
        %v458 = vrot.slane %v453, %v457
        %v461 = vcombine.low %v451, %v458
        %v463 = vunpack.c.l.s4 1983009808
        %v464 = vunpack.c.0.s8 %v463
        %v465 = vlaneseq
        %v466 = vshrl.u32 %v465, 7
        %v467 = vsub.s32 %v464, %v466
        %v468 = vrot.slane %v461, %v467
        %469 = vrot.lane.b32.xlu0 %v468, 2
        %v470 = vpop.permute.xlu0 %469
        %v471 = vrot.slane %v470, 6
        %vm472 = vcmask 15360
        %v473 = vsel %vm472, %v471, %v470
        %v475 = vmul.bf16 %v444, %v473
        %476 = vrot.lane.b32.xlu0 %v441, 16
        %v477 = vpop.permute.xlu0 %476
        %v478 = vrot.slane %v477, 6
        %vm479 = vcmask 130048
        %v480 = vsel %vm479, %v478, %v477
        %v482 = vmul.bf16 %v444, %v480
        %483 = vrot.lane.b32.xlu0 %v468, 18
        %v484 = vpop.permute.xlu0 %483
        %v485 = vrot.slane %v484, 6
        %vm486 = vcmask 146432
        %v487 = vsel %vm486, %v485, %v484
        %v489 = vmul.bf16 %v444, %v487
        %490 = vrot.lane.b32.xlu0 %v441, 32
        %v491 = vpop.permute.xlu0 %490
        %v492 = vrot.slane %v491, 6
        %vm493 = vcmask 261120
        %v494 = vsel %vm493, %v492, %v491
        %v496 = vmul.bf16 %v444, %v494
        %497 = vrot.lane.b32.xlu0 %v468, 34
        %v498 = vpop.permute.xlu0 %497
        %v499 = vrot.slane %v498, 6
        %vm500 = vcmask 277504
        %v501 = vsel %vm500, %v499, %v498
        %v503 = vmul.bf16 %v444, %v501
        %v506 = vunpack.c.l.s4 1983009808
        %v507 = vunpack.c.0.s8 %v506
        %v508 = vlaneseq
        %v509 = vshrl.u32 %v508, 7
        %v510 = vsub.s32 %v507, %v509
        %v511 = vrot.slane %v443, %v510
        %v512 = vcombine.high %v511, %v511
        %v514 = vcombine.low %v444, %v444
        %v516 = vunpack.c.l.s4 1983009808
        %v517 = vunpack.c.0.s8 %v516
        %v518 = vlaneseq
        %v519 = vshrl.u32 %v518, 7
        %v520 = vsub.s32 %v517, %v519
        %v521 = vrot.slane %v514, %v520
        %v523 = vunpack.c.l.s4 1983009808
        %v524 = vunpack.c.0.s8 %v523
        %v525 = vlaneseq
        %v526 = vshrl.u32 %v525, 7
        %v527 = vsub.s32 %v524, %v526
        %v528 = vrot.slane %v444, %v527
        %v529 = vcombine.high %v521, %v521
        %530 = vrot.lane.b32.xlu0 %v521, 127
        %v531 = vpop.permute.xlu0 %530
        %532 = vrot.lane.b32.xlu0 %v529, 127
        %v533 = vpop.permute.xlu0 %532
        %534 = vrot.lane.b32.xlu0 %v528, 127
        %v535 = vpop.permute.xlu0 %534
        %vm536 = vcmask 1039360
        %v537 = vsel %vm536, %v531, %v533
        %v538 = vsel %vm536, %v533, %v535
        %v540 = vcombine.high %v475, %v475
        %v542 = vunpack.c.l.s4 1983009808
        %v543 = vunpack.c.0.s8 %v542
        %v544 = vlaneseq
        %v545 = vshrl.u32 %v544, 7
        %v546 = vsub.s32 %v543, %v545
        %v547 = vrot.slane %v475, %v546
        %v549 = vunpack.c.l.s4 1983009808
        %v550 = vunpack.c.0.s8 %v549
        %v551 = vlaneseq
        %v552 = vshrl.u32 %v551, 7
        %v553 = vsub.s32 %v550, %v552
        %v554 = vrot.slane %v540, %v553
        %v555 = vcombine.low %v547, %v547
        %v556 = vcombine.low %v554, %v554
        %557 = vrot.lane.b32.xlu0 %v555, 126
        %v558 = vpop.permute.xlu0 %557
        %559 = vrot.lane.b32.xlu0 %v547, 126
        %v560 = vpop.permute.xlu0 %559
        %561 = vrot.lane.b32.xlu0 %v556, 126
        %v562 = vpop.permute.xlu0 %561
        %vm563 = vcmask 1031168
        %v564 = vsel %vm563, %v558, %v560
        %v565 = vsel %vm563, %v560, %v562
        %v567 = vcombine.low %v482, %v482
        %v569 = vunpack.c.l.s4 1983009808
        %v570 = vunpack.c.0.s8 %v569
        %v571 = vlaneseq
        %v572 = vshrl.u32 %v571, 7
        %v573 = vsub.s32 %v570, %v572
        %v574 = vrot.slane %v567, %v573
        %v576 = vunpack.c.l.s4 1983009808
        %v577 = vunpack.c.0.s8 %v576
        %v578 = vlaneseq
        %v579 = vshrl.u32 %v578, 7
        %v580 = vsub.s32 %v577, %v579
        %v581 = vrot.slane %v482, %v580
        %v582 = vcombine.low %v574, %v574
        %v583 = vcombine.low %v581, %v581
        %584 = vrot.lane.b32.xlu0 %v582, 112
        %v585 = vpop.permute.xlu0 %584
        %586 = vrot.lane.b32.xlu0 %v574, 112
        %v587 = vpop.permute.xlu0 %586
        %588 = vrot.lane.b32.xlu0 %v583, 112
        %v589 = vpop.permute.xlu0 %588
        %vm590 = vcmask 916480
        %v591 = vsel %vm590, %v585, %v587
        %v592 = vsel %vm590, %v587, %v589
        %v593 = vcombine.high %v444, %v444
        %v595 = vunpack.c.l.s4 1983009808
        %v596 = vunpack.c.0.s8 %v595
        %v597 = vlaneseq
        %v598 = vshrl.u32 %v597, 7
        %v599 = vsub.s32 %v596, %v598
        %v600 = vrot.slane %v593, %v599
        %v601 = vcombine.high %v528, %v528
        %602 = vrot.lane.b32.xlu0 %v528, 111
        %v603 = vpop.permute.xlu0 %602
        %604 = vrot.lane.b32.xlu0 %v601, 111
        %v605 = vpop.permute.xlu0 %604
        %606 = vrot.lane.b32.xlu0 %v600, 111
        %v607 = vpop.permute.xlu0 %606
        %vm608 = vcmask 908288
        %v609 = vsel %vm608, %v603, %v605
        %v610 = vsel %vm608, %v605, %v607
        %v612 = vcombine.low %v489, %v489
        %v614 = vunpack.c.l.s4 1983009808
        %v615 = vunpack.c.0.s8 %v614
        %v616 = vlaneseq
        %v617 = vshrl.u32 %v616, 7
        %v618 = vsub.s32 %v615, %v617
        %v619 = vrot.slane %v612, %v618
        %v621 = vunpack.c.l.s4 1983009808
        %v622 = vunpack.c.0.s8 %v621
        %v623 = vlaneseq
        %v624 = vshrl.u32 %v623, 7
        %v625 = vsub.s32 %v622, %v624
        %v626 = vrot.slane %v489, %v625
        %v627 = vcombine.high %v619, %v619
        %628 = vrot.lane.b32.xlu0 %v619, 110
        %v629 = vpop.permute.xlu0 %628
        %630 = vrot.lane.b32.xlu0 %v627, 110
        %v631 = vpop.permute.xlu0 %630
        %632 = vrot.lane.b32.xlu0 %v626, 110
        %v633 = vpop.permute.xlu0 %632
        %vm634 = vcmask 900096
        %v635 = vsel %vm634, %v629, %v631
        %v636 = vsel %vm634, %v631, %v633
        %v638 = vcombine.high %v496, %v496
        %v640 = vunpack.c.l.s4 1983009808
        %v641 = vunpack.c.0.s8 %v640
        %v642 = vlaneseq
        %v643 = vshrl.u32 %v642, 7
        %v644 = vsub.s32 %v641, %v643
        %v645 = vrot.slane %v496, %v644
        %v647 = vunpack.c.l.s4 1983009808
        %v648 = vunpack.c.0.s8 %v647
        %v649 = vlaneseq
        %v650 = vshrl.u32 %v649, 7
        %v651 = vsub.s32 %v648, %v650
        %v652 = vrot.slane %v638, %v651
        %v653 = vcombine.low %v645, %v645
        %v654 = vcombine.low %v652, %v652
        %655 = vrot.lane.b32.xlu0 %v653, 96
        %v656 = vpop.permute.xlu0 %655
        %657 = vrot.lane.b32.xlu0 %v645, 96
        %v658 = vpop.permute.xlu0 %657
        %659 = vrot.lane.b32.xlu0 %v654, 96
        %v660 = vpop.permute.xlu0 %659
        %vm661 = vcmask 785408
        %v662 = vsel %vm661, %v656, %v658
        %v663 = vsel %vm661, %v658, %v660
        %v664 = vcombine.low %v521, %v521
        %v665 = vcombine.low %v528, %v528
        %666 = vrot.lane.b32.xlu0 %v664, 95
        %v667 = vpop.permute.xlu0 %666
        %668 = vrot.lane.b32.xlu0 %v521, 95
        %v669 = vpop.permute.xlu0 %668
        %670 = vrot.lane.b32.xlu0 %v665, 95
        %v671 = vpop.permute.xlu0 %670
        %vm672 = vcmask 777216
        %v673 = vsel %vm672, %v667, %v669
        %v674 = vsel %vm672, %v669, %v671
        %v676 = vcombine.high %v503, %v503
        %v678 = vunpack.c.l.s4 1983009808
        %v679 = vunpack.c.0.s8 %v678
        %v680 = vlaneseq
        %v681 = vshrl.u32 %v680, 7
        %v682 = vsub.s32 %v679, %v681
        %v683 = vrot.slane %v503, %v682
        %v685 = vunpack.c.l.s4 1983009808
        %v686 = vunpack.c.0.s8 %v685
        %v687 = vlaneseq
        %v688 = vshrl.u32 %v687, 7
        %v689 = vsub.s32 %v686, %v688
        %v690 = vrot.slane %v676, %v689
        %v691 = vcombine.high %v683, %v683
        %692 = vrot.lane.b32.xlu0 %v683, 94
        %v693 = vpop.permute.xlu0 %692
        %694 = vrot.lane.b32.xlu0 %v691, 94
        %v695 = vpop.permute.xlu0 %694
        %696 = vrot.lane.b32.xlu0 %v690, 94
        %v697 = vpop.permute.xlu0 %696
        %vm698 = vcmask 769024
        %v699 = vsel %vm698, %v693, %v695
        %v700 = vsel %vm698, %v695, %v697
        %vm701 = vcmask 1041408
        %v704 = vsel %vm701, %v511, %v537
        %v707 = vsel %vm701, %v512, %v538
        %vm708 = vcmask 1043456
        %v710 = vsel %vm708, %v704, %v564
        %v712 = vsel %vm708, %v707, %v565
        %vm713 = vcmask 1045504
        %v715 = vsel %vm713, %v710, %v591
        %v718 = vsel %vm713, %v712, %v592
        %v722 = vsel %vm701, %v609, %v635
        %v725 = vsel %vm701, %v610, %v636
        %v727 = vsel %vm708, %v722, %v662
        %v729 = vsel %vm708, %v725, %v663
        %v731 = vsel %vm713, %v727, %v673
        %v734 = vsel %vm713, %v729, %v674
        %v736 = vld [vmem:[%s1] sm:$0x3]
        %vm737 = vcmask 293888
        %v739 = vsel %vm737, %v736, 0
        %v742 = vsel %vm701, %v699, 0
        %v745 = vsel %vm701, %v700, 0
        %747 = vmatprep.subr.bf16.mxu0 %v718
        %748 = vmatpush1.bf16.msra.mxu0 %v715
        %749 = vmatprep.subr.bf16.mxu0 %v734
        %750 = vmatpush1.bf16.msra.mxu0 %v731
        %751 = vmatprep.subr.bf16.mxu0 %v745
        %752 = vmatpush1.bf16.msra.mxu0 %v742
        %753 = vmatprep.subr.bf16.mxu0 0
        %754 = vmatpush1.bf16.msra.mxu0 0
        %755 = vmatprep.subr.bf16.mxu0 0
        %756 = vmatpush1.bf16.msra.mxu0 0
        %757 = vmatprep.subr.bf16.mxu0 0
        %758 = vmatpush1.bf16.msra.mxu0 0
        %759 = vmatprep.subr.bf16.mxu0 0
        %760 = vmatpush1.bf16.msra.mxu0 0
        %761 = vmatprep.subr.bf16.mxu0 0
        %762 = vmatpush1.bf16.msra.mxu0 0
        %763 = vmatprep.subr.bf16.mxu0 0
        %764 = vmatpush1.bf16.msra.mxu0 0
        %765 = vmatprep.subr.bf16.mxu0 0
        %766 = vmatpush1.bf16.msra.mxu0 0
        %767 = vmatprep.subr.bf16.mxu0 0
        %768 = vmatpush1.bf16.msra.mxu0 0
        %769 = vmatprep.subr.bf16.mxu0 0
        %770 = vmatpush1.bf16.msra.mxu0 0
        %771 = vmatprep.subr.bf16.mxu0 0
        %772 = vmatpush1.bf16.msra.mxu0 0
        %773 = vmatprep.subr.bf16.mxu0 0
        %774 = vmatpush1.bf16.msra.mxu0 0
        %775 = vmatprep.subr.bf16.mxu0 0
        %776 = vmatpush1.bf16.msra.mxu0 0
        %777 = vmatprep.subr.bf16.mxu0 0
        %778 = vmatpush1.bf16.msra.mxu0 0
        %779 = vmatprep.mubr.bf16.mxu0 0
        %780 = vmatmul.mubr.bf16.gmra.mrb[0].mxu0 %v739
        %v781 = vpop.f32.mrb[0].mxu0
        %v782 = vadd.f32 0.0, %v781
        %v783 = vpop.f32.mrb[0].mxu0
        %v784 = vadd.f32 0.0, %v783
        %v785 = vpop.f32.mrb[0].mxu0
        %v786 = vpop.f32.mrb[0].mxu0
        %787 = vdwg.mxu0
        %v788 = vld [vmem:[%s5] sm:$0xf]
        %790 = vset.pattern.permute.xlu0 0
        %791 = vperm.xlu0 %790, %v788
        %v792 = vpop.permute.xlu0 %791
        %v794 = vmul.f32 %v782, %v792
        %v795 = vmul.f32 %v784, %v792
        %v796 = vld [vmem:[%s6] sm:$0xf]
        %798 = vset.pattern.permute.xlu0 0
        %799 = vperm.xlu0 %798, %v796
        %v800 = vpop.permute.xlu0 %799
        %v802 = vadd.f32 %v794, %v800
        %v803 = vadd.f32 %v795, %v800
        %v804 = vmax.f32 %v802, 0.0
        %v805 = vmax.f32 %v803, 0.0
        %v806 = vpack.c.bf16 %v804, %v804
        %v807 = vpack.c.bf16 %v805, %v805
        %v810 = vcombine.low %v806, %v807
        %v812 = vunpack.c.l.s4 1983009808
        %v813 = vunpack.c.0.s8 %v812
        %v814 = vlaneseq
        %v815 = vshrl.u32 %v814, 7
        %v816 = vsub.s32 %v813, %v815
        %v817 = vrot.slane %v810, %v816
        %818 = vrot.lane.b32.xlu0 %v817, 17
        %v819 = vpop.permute.xlu0 %818
        %v820 = vrot.slane %v819, 6
        %v821 = vsel %vm385, %v820, %v819
        %823 = vst.msk [vmem:[#allocation2] sm:$0x3f] %vm392, %v821
        %v824 = vld [vmem:[#allocation2] sm:$0xf]
        %v825 = vmul.bf16 %v824, %v441
        %v826 = vld [vmem:[#allocation2] sm:$0x3f]
        %v827 = vmul.bf16 %v826, %v473
        %v828 = vmul.bf16 %v826, %v480
        %v829 = vmul.bf16 %v826, %v487
        %v830 = vmul.bf16 %v826, %v494
        %v831 = vmul.bf16 %v826, %v501
        %v834 = vunpack.c.l.s4 1983009808
        %v835 = vunpack.c.0.s8 %v834
        %v836 = vlaneseq
        %v837 = vshrl.u32 %v836, 7
        %v838 = vsub.s32 %v835, %v837
        %v839 = vrot.slane %v825, %v838
        %v840 = vcombine.high %v839, %v839
        %v842 = vcombine.low %v826, %v826
        %v844 = vunpack.c.l.s4 1983009808
        %v845 = vunpack.c.0.s8 %v844
        %v846 = vlaneseq
        %v847 = vshrl.u32 %v846, 7
        %v848 = vsub.s32 %v845, %v847
        %v849 = vrot.slane %v842, %v848
        %v851 = vunpack.c.l.s4 1983009808
        %v852 = vunpack.c.0.s8 %v851
        %v853 = vlaneseq
        %v854 = vshrl.u32 %v853, 7
        %v855 = vsub.s32 %v852, %v854
        %v856 = vrot.slane %v826, %v855
        %v857 = vcombine.high %v849, %v849
        %858 = vrot.lane.b32.xlu0 %v849, 127
        %v859 = vpop.permute.xlu0 %858
        %860 = vrot.lane.b32.xlu0 %v857, 127
        %v861 = vpop.permute.xlu0 %860
        %862 = vrot.lane.b32.xlu0 %v856, 127
        %v863 = vpop.permute.xlu0 %862
        %v864 = vsel %vm536, %v859, %v861
        %v865 = vsel %vm536, %v861, %v863
        %v867 = vcombine.high %v827, %v827
        %v869 = vunpack.c.l.s4 1983009808
        %v870 = vunpack.c.0.s8 %v869
        %v871 = vlaneseq
        %v872 = vshrl.u32 %v871, 7
        %v873 = vsub.s32 %v870, %v872
        %v874 = vrot.slane %v827, %v873
        %v876 = vunpack.c.l.s4 1983009808
        %v877 = vunpack.c.0.s8 %v876
        %v878 = vlaneseq
        %v879 = vshrl.u32 %v878, 7
        %v880 = vsub.s32 %v877, %v879
        %v881 = vrot.slane %v867, %v880
        %v882 = vcombine.low %v874, %v874
        %v883 = vcombine.low %v881, %v881
        %884 = vrot.lane.b32.xlu0 %v882, 126
        %v885 = vpop.permute.xlu0 %884
        %886 = vrot.lane.b32.xlu0 %v874, 126
        %v887 = vpop.permute.xlu0 %886
        %888 = vrot.lane.b32.xlu0 %v883, 126
        %v889 = vpop.permute.xlu0 %888
        %v890 = vsel %vm563, %v885, %v887
        %v891 = vsel %vm563, %v887, %v889
        %v893 = vcombine.low %v828, %v828
        %v895 = vunpack.c.l.s4 1983009808
        %v896 = vunpack.c.0.s8 %v895
        %v897 = vlaneseq
        %v898 = vshrl.u32 %v897, 7
        %v899 = vsub.s32 %v896, %v898
        %v900 = vrot.slane %v893, %v899
        %v902 = vunpack.c.l.s4 1983009808
        %v903 = vunpack.c.0.s8 %v902
        %v904 = vlaneseq
        %v905 = vshrl.u32 %v904, 7
        %v906 = vsub.s32 %v903, %v905
        %v907 = vrot.slane %v828, %v906
        %v908 = vcombine.low %v900, %v900
        %v909 = vcombine.low %v907, %v907
        %910 = vrot.lane.b32.xlu0 %v908, 112
        %v911 = vpop.permute.xlu0 %910
        %912 = vrot.lane.b32.xlu0 %v900, 112
        %v913 = vpop.permute.xlu0 %912
        %914 = vrot.lane.b32.xlu0 %v909, 112
        %v915 = vpop.permute.xlu0 %914
        %v916 = vsel %vm590, %v911, %v913
        %v917 = vsel %vm590, %v913, %v915
        %v918 = vcombine.high %v826, %v826
        %v920 = vunpack.c.l.s4 1983009808
        %v921 = vunpack.c.0.s8 %v920
        %v922 = vlaneseq
        %v923 = vshrl.u32 %v922, 7
        %v924 = vsub.s32 %v921, %v923
        %v925 = vrot.slane %v918, %v924
        %v926 = vcombine.high %v856, %v856
        %927 = vrot.lane.b32.xlu0 %v856, 111
        %v928 = vpop.permute.xlu0 %927
        %929 = vrot.lane.b32.xlu0 %v926, 111
        %v930 = vpop.permute.xlu0 %929
        %931 = vrot.lane.b32.xlu0 %v925, 111
        %v932 = vpop.permute.xlu0 %931
        %v933 = vsel %vm608, %v928, %v930
        %v934 = vsel %vm608, %v930, %v932
        %v936 = vcombine.low %v829, %v829
        %v938 = vunpack.c.l.s4 1983009808
        %v939 = vunpack.c.0.s8 %v938
        %v940 = vlaneseq
        %v941 = vshrl.u32 %v940, 7
        %v942 = vsub.s32 %v939, %v941
        %v943 = vrot.slane %v936, %v942
        %v945 = vunpack.c.l.s4 1983009808
        %v946 = vunpack.c.0.s8 %v945
        %v947 = vlaneseq
        %v948 = vshrl.u32 %v947, 7
        %v949 = vsub.s32 %v946, %v948
        %v950 = vrot.slane %v829, %v949
        %v951 = vcombine.high %v943, %v943
        %952 = vrot.lane.b32.xlu0 %v943, 110
        %v953 = vpop.permute.xlu0 %952
        %954 = vrot.lane.b32.xlu0 %v951, 110
        %v955 = vpop.permute.xlu0 %954
        %956 = vrot.lane.b32.xlu0 %v950, 110
        %v957 = vpop.permute.xlu0 %956
        %v958 = vsel %vm634, %v953, %v955
        %v959 = vsel %vm634, %v955, %v957
        %v961 = vcombine.high %v830, %v830
        %v963 = vunpack.c.l.s4 1983009808
        %v964 = vunpack.c.0.s8 %v963
        %v965 = vlaneseq
        %v966 = vshrl.u32 %v965, 7
        %v967 = vsub.s32 %v964, %v966
        %v968 = vrot.slane %v830, %v967
        %v970 = vunpack.c.l.s4 1983009808
        %v971 = vunpack.c.0.s8 %v970
        %v972 = vlaneseq
        %v973 = vshrl.u32 %v972, 7
        %v974 = vsub.s32 %v971, %v973
        %v975 = vrot.slane %v961, %v974
        %v976 = vcombine.low %v968, %v968
        %v977 = vcombine.low %v975, %v975
        %978 = vrot.lane.b32.xlu0 %v976, 96
        %v979 = vpop.permute.xlu0 %978
        %980 = vrot.lane.b32.xlu0 %v968, 96
        %v981 = vpop.permute.xlu0 %980
        %982 = vrot.lane.b32.xlu0 %v977, 96
        %v983 = vpop.permute.xlu0 %982
        %v984 = vsel %vm661, %v979, %v981
        %v985 = vsel %vm661, %v981, %v983
        %v986 = vcombine.low %v849, %v849
        %v987 = vcombine.low %v856, %v856
        %988 = vrot.lane.b32.xlu0 %v986, 95
        %v989 = vpop.permute.xlu0 %988
        %990 = vrot.lane.b32.xlu0 %v849, 95
        %v991 = vpop.permute.xlu0 %990
        %992 = vrot.lane.b32.xlu0 %v987, 95
        %v993 = vpop.permute.xlu0 %992
        %v994 = vsel %vm672, %v989, %v991
        %v995 = vsel %vm672, %v991, %v993
        %v997 = vcombine.high %v831, %v831
        %v999 = vunpack.c.l.s4 1983009808
        %v1000 = vunpack.c.0.s8 %v999
        %v1001 = vlaneseq
        %v1002 = vshrl.u32 %v1001, 7
        %v1003 = vsub.s32 %v1000, %v1002
        %v1004 = vrot.slane %v831, %v1003
        %v1006 = vunpack.c.l.s4 1983009808
        %v1007 = vunpack.c.0.s8 %v1006
        %v1008 = vlaneseq
        %v1009 = vshrl.u32 %v1008, 7
        %v1010 = vsub.s32 %v1007, %v1009
        %v1011 = vrot.slane %v997, %v1010
        %v1012 = vcombine.high %v1004, %v1004
        %1013 = vrot.lane.b32.xlu0 %v1004, 94
        %v1014 = vpop.permute.xlu0 %1013
        %1015 = vrot.lane.b32.xlu0 %v1012, 94
        %v1016 = vpop.permute.xlu0 %1015
        %1017 = vrot.lane.b32.xlu0 %v1011, 94
        %v1018 = vpop.permute.xlu0 %1017
        %v1019 = vsel %vm698, %v1014, %v1016
        %v1020 = vsel %vm698, %v1016, %v1018
        %v1023 = vsel %vm701, %v839, %v864
        %v1026 = vsel %vm701, %v840, %v865
        %v1028 = vsel %vm708, %v1023, %v890
        %v1030 = vsel %vm708, %v1026, %v891
        %v1032 = vsel %vm713, %v1028, %v916
        %v1035 = vsel %vm713, %v1030, %v917
        %v1039 = vsel %vm701, %v933, %v958
        %v1042 = vsel %vm701, %v934, %v959
        %v1044 = vsel %vm708, %v1039, %v984
        %v1046 = vsel %vm708, %v1042, %v985
        %v1048 = vsel %vm713, %v1044, %v994
        %v1051 = vsel %vm713, %v1046, %v995
        %v1053 = vld [vmem:[%s2] sm:$0x3]
        %v1054 = vld [vmem:[%s7] sm:$0xf]
        %1056 = vset.pattern.permute.xlu0 0
        %1057 = vperm.xlu0 %1056, %v1054
        %v1058 = vpop.permute.xlu0 %1057
        %v1061 = vsel %vm737, %v1053, 0
        %v1064 = vsel %vm701, %v1019, 0
        %v1067 = vsel %vm701, %v1020, 0
        %1069 = vmatprep.subr.bf16.mxu0 %v1035
        %1070 = vmatpush1.bf16.msra.mxu0 %v1032
        %1071 = vmatprep.subr.bf16.mxu0 %v1051
        %1072 = vmatpush1.bf16.msra.mxu0 %v1048
        %1073 = vmatprep.subr.bf16.mxu0 %v1067
        %1074 = vmatpush1.bf16.msra.mxu0 %v1064
        %1075 = vmatprep.subr.bf16.mxu0 0
        %1076 = vmatpush1.bf16.msra.mxu0 0
        %1077 = vmatprep.subr.bf16.mxu0 0
        %1078 = vmatpush1.bf16.msra.mxu0 0
        %1079 = vmatprep.subr.bf16.mxu0 0
        %1080 = vmatpush1.bf16.msra.mxu0 0
        %1081 = vmatprep.subr.bf16.mxu0 0
        %1082 = vmatpush1.bf16.msra.mxu0 0
        %1083 = vmatprep.subr.bf16.mxu0 0
        %1084 = vmatpush1.bf16.msra.mxu0 0
        %1085 = vmatprep.subr.bf16.mxu0 0
        %1086 = vmatpush1.bf16.msra.mxu0 0
        %1087 = vmatprep.subr.bf16.mxu0 0
        %1088 = vmatpush1.bf16.msra.mxu0 0
        %1089 = vmatprep.subr.bf16.mxu0 0
        %1090 = vmatpush1.bf16.msra.mxu0 0
        %1091 = vmatprep.subr.bf16.mxu0 0
        %1092 = vmatpush1.bf16.msra.mxu0 0
        %1093 = vmatprep.subr.bf16.mxu0 0
        %1094 = vmatpush1.bf16.msra.mxu0 0
        %1095 = vmatprep.subr.bf16.mxu0 0
        %1096 = vmatpush1.bf16.msra.mxu0 0
        %1097 = vmatprep.subr.bf16.mxu0 0
        %1098 = vmatpush1.bf16.msra.mxu0 0
        %1099 = vmatprep.subr.bf16.mxu0 0
        %1100 = vmatpush1.bf16.msra.mxu0 0
        %1101 = vmatprep.mubr.bf16.mxu0 0
        %1102 = vmatmul.mubr.bf16.gmra.mrb[0].mxu0 %v1061
        %v1103 = vpop.f32.mrb[0].mxu0
        %v1104 = vadd.f32 %v1058, %v1103
        %v1105 = vpop.f32.mrb[0].mxu0
        %v1106 = vadd.f32 %v1058, %v1105
        %v1107 = vpop.f32.mrb[0].mxu0
        %v1108 = vpop.f32.mrb[0].mxu0
        %1109 = vdwg.mxu0
        %v1112 = vcombine.low %v1104, %v1106
        %v1114 = vadd.f32 %v332, %v1112
        %1115 = vst [vmem:[%s325] sm:$0xff] %v1114
        %s1116 = sand.u32 %s225, 1
        %s1117 = scalar_lea.sflag [#allocation4], %s1116
        %s1118 = sand.u32 %s225, 1
        %s1119 = smul.addr %s1118, 8
        %s1120 = scalar_lea.vmem [#allocation3], %s1119
        // Predicated region
        $region57: #{tpu_custom_call.1} parent=55 // pred_check
          %p1121 = pneg %p235
        $region58: #{tpu_custom_call.1} parent=55 // pred_check_branch
          %1123 = sbr.rel (%p1121) target = $region60
        $region59: #{tpu_custom_call.1} parent=55 // pred_region
          %s1125 = ssub.s32 128, 128
          %1126 = vsyncadd %s1117, %s1125
          %s1127 = smul.addr %s23, 2
          %s1128 = smul.addr %s1127, 64
          %s1129 = scalar_lea.hbm %s9, %s1128
          %s1131 = sshll.u32 %s1120, 4
          %s1132 = int_to_ptr.vmem [resolvable:$true] %s1131
          %1134 = dma.vmem_to_hbm [thread:$0]  %s1132, 128, %s1129, %s1117
        $region60: #{tpu_custom_call.1} parent=55 // pred_fallthru
          _
      $region56: #{tpu_custom_call.1} parent=5 // pred_fallthru
        _
      %p1135 = scmp.le.s32.totalorder 2, %s18
      // Predicated region
      $region61: #{tpu_custom_call.1} parent=5 // pred_check
        %p1136 = pneg %p1135
      $region62: #{tpu_custom_call.1} parent=5 // pred_check_branch
        %1138 = sbr.rel (%p1136) target = $region64
      $region63: #{tpu_custom_call.1} parent=5 // pred_region
        %s1139 = ssub.s32 %s18, 2
        // Predicated region
        $region65: #{tpu_custom_call.1} parent=63 // pred_check
          %p1140 = pneg %p241
        $region66: #{tpu_custom_call.1} parent=63 // pred_check_branch
          %1142 = sbr.rel (%p1140) target = $region68
        $region67: #{tpu_custom_call.1} parent=63 // pred_region
          %s1143 = sand.u32 %s226, 1
          %s1144 = scalar_lea.sflag [#allocation4], %s1143
          %s1145 = sand.u32 %s226, 1
          %s1146 = smul.addr %s1145, 8
          %s1147 = scalar_lea.vmem [#allocation3], %s1146
          %1148 = dma.done %s1144, 128
        $region68: #{tpu_custom_call.1} parent=63 // pred_fallthru
          _
      $region64: #{tpu_custom_call.1} parent=5 // pred_fallthru
        _
    $region6: #{tpu_custom_call.1} parent=1 // loop_footer
      %s22 = sadd.s32 1, %s18
    $region7: #{tpu_custom_call.1} parent=1 // loop_footer_branch
      %17 = sbr.rel target = $region3
    $region8: #{tpu_custom_call.1} parent=1 // loop_exit
      _
    %1149 = vsyncpa [#allocation4], 1
    %s1150 = scalar_lea.sflag [#allocation4], 1
    %1151 = vsyncpa %s1150, 1

</llo_original>
